<compile_context>
chip_gen: v6e
topology: v6e:2x2x1
jax: 0.10.0
libtpu: 0.0.40
codegen_flags: <defaults>
</compile_context>

<pallas_src>
import functools

import jax
import jax.numpy as jnp
from jax import lax
from jax.experimental import pallas as pl
from jax.experimental.pallas import tpu as pltpu


def _attn_kernel(x_ref, wqkv_ref, wo_ref, b_ref, o_ref, *, heads, dim_head):
    """One grid step = one batch element. All heads fused in-body.

    x_ref    : (N, D)        bf16
    wqkv_ref : (D, 3*H*Dh)   bf16  (scale already folded into the Q columns)
    wo_ref   : (H*Dh, D)     bf16
    b_ref    : (1, D)        f32
    o_ref    : (N, D)        x.dtype
    """
    H, Dh = heads, dim_head
    inner = H * Dh

    x = x_ref[...]                                                   # (N, D) bf16

    # Single fused QKV projection (output lane dim = 3*H*Dh).
    qkv = jnp.dot(x, wqkv_ref[...],
                  preferred_element_type=jnp.float32)                # (N, 3*inner) f32

    head_outs = []
    for h in range(H):                                               # static unroll
        q = qkv[:, h * Dh:(h + 1) * Dh].astype(jnp.bfloat16)         # (N, Dh)
        k = qkv[:, inner + h * Dh: inner + (h + 1) * Dh].astype(jnp.bfloat16)
        v = qkv[:, 2 * inner + h * Dh: 2 * inner + (h + 1) * Dh].astype(jnp.bfloat16)

        # q @ k^T without materializing a transpose of k.
        s = lax.dot_general(q, k, (((1,), (1,)), ((), ())),
                            preferred_element_type=jnp.float32)      # (N, N) f32

        # Softmax in f32 (scale was folded into Wq).
        s = s - jnp.max(s, axis=-1, keepdims=True)
        p = jnp.exp(s)
        attn = p * pl.reciprocal(jnp.sum(p, axis=-1, keepdims=True), approx=True)

        head_outs.append(
            jnp.dot(attn.astype(jnp.bfloat16), v,
                    preferred_element_type=jnp.float32))             # (N, Dh) f32

    out = jnp.concatenate(head_outs, axis=-1).astype(jnp.bfloat16)   # (N, inner)

    # Single fused output projection + bias, single store.
    proj = jnp.dot(out, wo_ref[...], preferred_element_type=jnp.float32)   # (N, D)
    o_ref[...] = (proj + b_ref[...]).astype(o_ref.dtype)


def attention_f_pallas(x, w_qkv, w_out, b_out, *, heads, dim_head):
    """x: [B, N, D]; w_qkv: [3*H*Dh, D] (PyTorch Linear weight layout);
    w_out: [D, H*Dh]; b_out: [D]."""
    B, N, D = x.shape
    H, Dh = heads, dim_head
    inner = H * Dh
    scale = float(Dh) ** -0.5

    # ---- glue: fuse PyTorch-layout weights (in a real model these would be
    # pre-fused/pre-cast once, not per call) ----
    wq = w_qkv[0 * inner:1 * inner, :] * scale        # fold softmax scale into Wq
    wk = w_qkv[1 * inner:2 * inner, :]
    wv = w_qkv[2 * inner:3 * inner, :]
    wqkv = jnp.concatenate([wq, wk, wv], axis=0).T    # (D, 3*inner), x @ wqkv = qkv
    wo = w_out.T                                      # (inner, D)
    bo = b_out.reshape(1, D).astype(jnp.float32)

    # bf16 MXU inputs, f32 accumulation (softmax math stays f32 in-kernel).
    x_flat = x.reshape(B * N, D).astype(jnp.bfloat16)
    wqkv_bf = wqkv.astype(jnp.bfloat16)
    wo_bf = wo.astype(jnp.bfloat16)

    kernel = functools.partial(_attn_kernel, heads=H, dim_head=Dh)

    out_flat = pl.pallas_call(
        kernel,
        out_shape=jax.ShapeDtypeStruct((B * N, D), x.dtype),
        grid_spec=pltpu.PrefetchScalarGridSpec(
            num_scalar_prefetch=0,
            grid=(B,),
            in_specs=[
                pl.BlockSpec((N, D), lambda b: (b, 0)),             # x rows of batch b
                pl.BlockSpec((D, 3 * inner), lambda b: (0, 0)),     # fused Wqkv (resident)
                pl.BlockSpec((inner, D), lambda b: (0, 0)),         # Wo (resident)
                pl.BlockSpec((1, D), lambda b: (0, 0)),             # bias (resident)
            ],
            out_specs=pl.BlockSpec((N, D), lambda b: (b, 0)),
        ),
        compiler_params=pltpu.CompilerParams(
            dimension_semantics=("parallel",)),
    )(x_flat, wqkv_bf, wo_bf, bo)

    return out_flat.reshape(B, N, D)


def attention_f_ref(x, w_qkv, w_out, b_out, *, heads, dim_head):
    """Pure-JAX reference mirroring the PyTorch forward (eval mode)."""
    B, N, D = x.shape
    H, Dh = heads, dim_head
    inner = H * Dh
    scale = float(Dh) ** -0.5
    qkv = x @ w_qkv.T                                  # (B, N, 3*inner)
    q, k, v = jnp.split(qkv, 3, axis=-1)

    def split_heads(t):
        return t.reshape(B, N, H, Dh).transpose(0, 2, 1, 3)   # (B, H, N, Dh)

    q, k, v = map(split_heads, (q, k, v))
    dots = jnp.einsum("bhnd,bhmd->bhnm", q, k) * scale
    attn = jax.nn.softmax(dots, axis=-1)
    out = jnp.einsum("bhnm,bhmd->bhnd", attn, v)
    out = out.transpose(0, 2, 1, 3).reshape(B, N, inner)
    return out @ w_out.T + b_out


if __name__ == "__main__":
    # Small shapes consistent with the module: dim=32, heads=4, dim_head=16.
    B, N, D = 2, 8, 32
    H, Dh = 4, 16
    inner = H * Dh

    key = jax.random.PRNGKey(0)
    kx, kqkv, kwo, kbo = jax.random.split(key, 4)
    x = jax.random.normal(kx, (B, N, D), dtype=jnp.float32)
    # deterministic "parameters" (PyTorch Linear weight layouts: [out, in])
    w_qkv = jax.random.normal(kqkv, (3 * inner, D), dtype=jnp.float32) * 0.05
    w_out = jax.random.normal(kwo, (D, inner), dtype=jnp.float32) * 0.05
    b_out = jax.random.normal(kbo, (D,), dtype=jnp.float32) * 0.05

    y = attention_f_pallas(x, w_qkv, w_out, b_out, heads=H, dim_head=Dh)
    y = jax.block_until_ready(y)

    y_ref = attention_f_ref(x, w_qkv, w_out, b_out, heads=H, dim_head=Dh)
    # bf16 MXU inputs + approx reciprocal -> slightly looser tolerance.
    assert jnp.allclose(y, y_ref, atol=2e-2, rtol=2e-2), "mismatch vs reference"

    print("KERNEL_OK")
</pallas_src>

<mosaic_0001>
module attributes {stable_mosaic.version = 11 : i64} {
  func.func @_attn_kernel(%arg0: i32, %arg1: memref<8x32xbf16, #tpu.memory_space<vmem>>, %arg2: memref<32x192xbf16, #tpu.memory_space<vmem>>, %arg3: memref<64x32xbf16, #tpu.memory_space<vmem>>, %arg4: memref<1x32xf32, #tpu.memory_space<vmem>>, %arg5: memref<8x32xf32, #tpu.memory_space<vmem>>) attributes {dimension_semantics = [#tpu.dimension_semantics<parallel>], iteration_bounds = array<i64: 2>, scalar_prefetch = 0 : i64, scratch_operands = 0 : i64, tpu.core_type = #tpu.core_type<tc>, window_params = [{transform_indices = @transform_0, window_bounds = array<i64: 8, 32>}, {pipeline_mode = #tpu.pipeline_mode<synchronous>, transform_indices = @transform_1, window_bounds = array<i64: 32, 192>}, {pipeline_mode = #tpu.pipeline_mode<synchronous>, transform_indices = @transform_2, window_bounds = array<i64: 64, 32>}, {pipeline_mode = #tpu.pipeline_mode<synchronous>, transform_indices = @transform_3, window_bounds = array<i64: 1, 32>}, {transform_indices = @transform_4, window_bounds = array<i64: 8, 32>}]} {
    %c0 = arith.constant 0 : index
    %c0_0 = arith.constant 0 : index
    %0 = vector.load %arg1[%c0, %c0_0] : memref<8x32xbf16, #tpu.memory_space<vmem>>, vector<8x32xbf16>
    %c0_1 = arith.constant 0 : index
    %c0_2 = arith.constant 0 : index
    %1 = vector.load %arg2[%c0_1, %c0_2] : memref<32x192xbf16, #tpu.memory_space<vmem>>, vector<32x192xbf16>
    %cst = arith.constant dense<0.000000e+00> : vector<8x192xf32>
    %2 = tpu.matmul %0, %1, %cst {dimension_numbers = #tpu.dot_dimension_numbers<[1], [0], [0], [1], [0, 0, 1, 1], [], []>} : vector<8x32xbf16>, vector<32x192xbf16>, vector<8x192xf32> -> vector<8x192xf32>
    %3 = vector.extract_strided_slice %2 {offsets = [0, 0], sizes = [8, 16], strides = [1, 1]} : vector<8x192xf32> to vector<8x16xf32>
    %4 = arith.truncf %3 : vector<8x16xf32> to vector<8x16xbf16>
    %5 = vector.extract_strided_slice %2 {offsets = [0, 64], sizes = [8, 16], strides = [1, 1]} : vector<8x192xf32> to vector<8x16xf32>
    %6 = arith.truncf %5 : vector<8x16xf32> to vector<8x16xbf16>
    %7 = vector.extract_strided_slice %2 {offsets = [0, 128], sizes = [8, 16], strides = [1, 1]} : vector<8x192xf32> to vector<8x16xf32>
    %8 = arith.truncf %7 : vector<8x16xf32> to vector<8x16xbf16>
    %cst_3 = arith.constant dense<0.000000e+00> : vector<8x8xf32>
    %9 = tpu.matmul %4, %6, %cst_3 {dimension_numbers = #tpu.dot_dimension_numbers<[1], [1], [0], [0], [0, 0, 1, 0], [], []>} : vector<8x16xbf16>, vector<8x16xbf16>, vector<8x8xf32> -> vector<8x8xf32>
    %cst_4 = arith.constant dense<0xFF800000> : vector<8xf32>
    %10 = vector.multi_reduction <maximumf>, %9, %cst_4 [1] : vector<8x8xf32> to vector<8xf32>
    %11 = vector.shape_cast %10 : vector<8xf32> to vector<8x1xf32>
    %12 = vector.broadcast %11 : vector<8x1xf32> to vector<8x8xf32>
    %13 = arith.subf %9, %12 : vector<8x8xf32>
    %14 = math.exp %13 : vector<8x8xf32>
    %cst_5 = arith.constant dense<0.000000e+00> : vector<8xf32>
    %15 = vector.multi_reduction <add>, %14, %cst_5 [1] : vector<8x8xf32> to vector<8xf32>
    %16 = vector.shape_cast %15 : vector<8xf32> to vector<8x1xf32>
    %17 = tpu.reciprocal %16 {approx = true} : vector<8x1xf32> -> vector<8x1xf32>
    %18 = vector.broadcast %17 : vector<8x1xf32> to vector<8x8xf32>
    %19 = arith.mulf %14, %18 : vector<8x8xf32>
    %20 = arith.truncf %19 : vector<8x8xf32> to vector<8x8xbf16>
    %cst_6 = arith.constant dense<0.000000e+00> : vector<8x16xf32>
    %21 = tpu.matmul %20, %8, %cst_6 {dimension_numbers = #tpu.dot_dimension_numbers<[1], [0], [0], [1], [0, 0, 1, 1], [], []>} : vector<8x8xbf16>, vector<8x16xbf16>, vector<8x16xf32> -> vector<8x16xf32>
    %22 = vector.extract_strided_slice %2 {offsets = [0, 16], sizes = [8, 16], strides = [1, 1]} : vector<8x192xf32> to vector<8x16xf32>
    %23 = arith.truncf %22 : vector<8x16xf32> to vector<8x16xbf16>
    %24 = vector.extract_strided_slice %2 {offsets = [0, 80], sizes = [8, 16], strides = [1, 1]} : vector<8x192xf32> to vector<8x16xf32>
    %25 = arith.truncf %24 : vector<8x16xf32> to vector<8x16xbf16>
    %26 = vector.extract_strided_slice %2 {offsets = [0, 144], sizes = [8, 16], strides = [1, 1]} : vector<8x192xf32> to vector<8x16xf32>
    %27 = arith.truncf %26 : vector<8x16xf32> to vector<8x16xbf16>
    %cst_7 = arith.constant dense<0.000000e+00> : vector<8x8xf32>
    %28 = tpu.matmul %23, %25, %cst_7 {dimension_numbers = #tpu.dot_dimension_numbers<[1], [1], [0], [0], [0, 0, 1, 0], [], []>} : vector<8x16xbf16>, vector<8x16xbf16>, vector<8x8xf32> -> vector<8x8xf32>
    %cst_8 = arith.constant dense<0xFF800000> : vector<8xf32>
    %29 = vector.multi_reduction <maximumf>, %28, %cst_8 [1] : vector<8x8xf32> to vector<8xf32>
    %30 = vector.shape_cast %29 : vector<8xf32> to vector<8x1xf32>
    %31 = vector.broadcast %30 : vector<8x1xf32> to vector<8x8xf32>
    %32 = arith.subf %28, %31 : vector<8x8xf32>
    %33 = math.exp %32 : vector<8x8xf32>
    %cst_9 = arith.constant dense<0.000000e+00> : vector<8xf32>
    %34 = vector.multi_reduction <add>, %33, %cst_9 [1] : vector<8x8xf32> to vector<8xf32>
    %35 = vector.shape_cast %34 : vector<8xf32> to vector<8x1xf32>
    %36 = tpu.reciprocal %35 {approx = true} : vector<8x1xf32> -> vector<8x1xf32>
    %37 = vector.broadcast %36 : vector<8x1xf32> to vector<8x8xf32>
    %38 = arith.mulf %33, %37 : vector<8x8xf32>
    %39 = arith.truncf %38 : vector<8x8xf32> to vector<8x8xbf16>
    %cst_10 = arith.constant dense<0.000000e+00> : vector<8x16xf32>
    %40 = tpu.matmul %39, %27, %cst_10 {dimension_numbers = #tpu.dot_dimension_numbers<[1], [0], [0], [1], [0, 0, 1, 1], [], []>} : vector<8x8xbf16>, vector<8x16xbf16>, vector<8x16xf32> -> vector<8x16xf32>
    %41 = vector.extract_strided_slice %2 {offsets = [0, 32], sizes = [8, 16], strides = [1, 1]} : vector<8x192xf32> to vector<8x16xf32>
    %42 = arith.truncf %41 : vector<8x16xf32> to vector<8x16xbf16>
    %43 = vector.extract_strided_slice %2 {offsets = [0, 96], sizes = [8, 16], strides = [1, 1]} : vector<8x192xf32> to vector<8x16xf32>
    %44 = arith.truncf %43 : vector<8x16xf32> to vector<8x16xbf16>
    %45 = vector.extract_strided_slice %2 {offsets = [0, 160], sizes = [8, 16], strides = [1, 1]} : vector<8x192xf32> to vector<8x16xf32>
    %46 = arith.truncf %45 : vector<8x16xf32> to vector<8x16xbf16>
    %cst_11 = arith.constant dense<0.000000e+00> : vector<8x8xf32>
    %47 = tpu.matmul %42, %44, %cst_11 {dimension_numbers = #tpu.dot_dimension_numbers<[1], [1], [0], [0], [0, 0, 1, 0], [], []>} : vector<8x16xbf16>, vector<8x16xbf16>, vector<8x8xf32> -> vector<8x8xf32>
    %cst_12 = arith.constant dense<0xFF800000> : vector<8xf32>
    %48 = vector.multi_reduction <maximumf>, %47, %cst_12 [1] : vector<8x8xf32> to vector<8xf32>
    %49 = vector.shape_cast %48 : vector<8xf32> to vector<8x1xf32>
    %50 = vector.broadcast %49 : vector<8x1xf32> to vector<8x8xf32>
    %51 = arith.subf %47, %50 : vector<8x8xf32>
    %52 = math.exp %51 : vector<8x8xf32>
    %cst_13 = arith.constant dense<0.000000e+00> : vector<8xf32>
    %53 = vector.multi_reduction <add>, %52, %cst_13 [1] : vector<8x8xf32> to vector<8xf32>
    %54 = vector.shape_cast %53 : vector<8xf32> to vector<8x1xf32>
    %55 = tpu.reciprocal %54 {approx = true} : vector<8x1xf32> -> vector<8x1xf32>
    %56 = vector.broadcast %55 : vector<8x1xf32> to vector<8x8xf32>
    %57 = arith.mulf %52, %56 : vector<8x8xf32>
    %58 = arith.truncf %57 : vector<8x8xf32> to vector<8x8xbf16>
    %cst_14 = arith.constant dense<0.000000e+00> : vector<8x16xf32>
    %59 = tpu.matmul %58, %46, %cst_14 {dimension_numbers = #tpu.dot_dimension_numbers<[1], [0], [0], [1], [0, 0, 1, 1], [], []>} : vector<8x8xbf16>, vector<8x16xbf16>, vector<8x16xf32> -> vector<8x16xf32>
    %60 = vector.extract_strided_slice %2 {offsets = [0, 48], sizes = [8, 16], strides = [1, 1]} : vector<8x192xf32> to vector<8x16xf32>
    %61 = arith.truncf %60 : vector<8x16xf32> to vector<8x16xbf16>
    %62 = vector.extract_strided_slice %2 {offsets = [0, 112], sizes = [8, 16], strides = [1, 1]} : vector<8x192xf32> to vector<8x16xf32>
    %63 = arith.truncf %62 : vector<8x16xf32> to vector<8x16xbf16>
    %64 = vector.extract_strided_slice %2 {offsets = [0, 176], sizes = [8, 16], strides = [1, 1]} : vector<8x192xf32> to vector<8x16xf32>
    %65 = arith.truncf %64 : vector<8x16xf32> to vector<8x16xbf16>
    %cst_15 = arith.constant dense<0.000000e+00> : vector<8x8xf32>
    %66 = tpu.matmul %61, %63, %cst_15 {dimension_numbers = #tpu.dot_dimension_numbers<[1], [1], [0], [0], [0, 0, 1, 0], [], []>} : vector<8x16xbf16>, vector<8x16xbf16>, vector<8x8xf32> -> vector<8x8xf32>
    %cst_16 = arith.constant dense<0xFF800000> : vector<8xf32>
    %67 = vector.multi_reduction <maximumf>, %66, %cst_16 [1] : vector<8x8xf32> to vector<8xf32>
    %68 = vector.shape_cast %67 : vector<8xf32> to vector<8x1xf32>
    %69 = vector.broadcast %68 : vector<8x1xf32> to vector<8x8xf32>
    %70 = arith.subf %66, %69 : vector<8x8xf32>
    %71 = math.exp %70 : vector<8x8xf32>
    %cst_17 = arith.constant dense<0.000000e+00> : vector<8xf32>
    %72 = vector.multi_reduction <add>, %71, %cst_17 [1] : vector<8x8xf32> to vector<8xf32>
    %73 = vector.shape_cast %72 : vector<8xf32> to vector<8x1xf32>
    %74 = tpu.reciprocal %73 {approx = true} : vector<8x1xf32> -> vector<8x1xf32>
    %75 = vector.broadcast %74 : vector<8x1xf32> to vector<8x8xf32>
    %76 = arith.mulf %71, %75 : vector<8x8xf32>
    %77 = arith.truncf %76 : vector<8x8xf32> to vector<8x8xbf16>
    %cst_18 = arith.constant dense<0.000000e+00> : vector<8x16xf32>
    %78 = tpu.matmul %77, %65, %cst_18 {dimension_numbers = #tpu.dot_dimension_numbers<[1], [0], [0], [1], [0, 0, 1, 1], [], []>} : vector<8x8xbf16>, vector<8x16xbf16>, vector<8x16xf32> -> vector<8x16xf32>
    %79 = tpu.concatenate %21, %40, %59, %78 in 1 : vector<8x16xf32>, vector<8x16xf32>, vector<8x16xf32>, vector<8x16xf32> -> vector<8x64xf32>
    %80 = arith.truncf %79 : vector<8x64xf32> to vector<8x64xbf16>
    %c0_19 = arith.constant 0 : index
    %c0_20 = arith.constant 0 : index
    %81 = vector.load %arg3[%c0_19, %c0_20] : memref<64x32xbf16, #tpu.memory_space<vmem>>, vector<64x32xbf16>
    %cst_21 = arith.constant dense<0.000000e+00> : vector<8x32xf32>
    %82 = tpu.matmul %80, %81, %cst_21 {dimension_numbers = #tpu.dot_dimension_numbers<[1], [0], [0], [1], [0, 0, 1, 1], [], []>} : vector<8x64xbf16>, vector<64x32xbf16>, vector<8x32xf32> -> vector<8x32xf32>
    %c0_22 = arith.constant 0 : index
    %c0_23 = arith.constant 0 : index
    %83 = vector.load %arg4[%c0_22, %c0_23] : memref<1x32xf32, #tpu.memory_space<vmem>>, vector<1x32xf32>
    %84 = vector.broadcast %83 : vector<1x32xf32> to vector<8x32xf32>
    %85 = arith.addf %82, %84 : vector<8x32xf32>
    %c0_24 = arith.constant 0 : index
    %c0_25 = arith.constant 0 : index
    %86 = vector.load %arg5[%c0_24, %c0_25] : memref<8x32xf32, #tpu.memory_space<vmem>>, vector<8x32xf32>
    tpu.vector_store %arg5[%c0_24, %c0_25], %85 {strides = array<i32>} : memref<8x32xf32, #tpu.memory_space<vmem>>, vector<8x32xf32>,
    return
  }
  func.func @transform_0(%arg0: i32) -> (i32, i32) {
    %c0_i32 = arith.constant 0 : i32
    %c0_i32_0 = arith.constant 0 : i32
    return %arg0, %c0_i32 : i32, i32
  }
  func.func @transform_1(%arg0: i32) -> (i32, i32) {
    %c0_i32 = arith.constant 0 : i32
    %c0_i32_0 = arith.constant 0 : i32
    %c0_i32_1 = arith.constant 0 : i32
    return %c0_i32, %c0_i32_0 : i32, i32
  }
  func.func @transform_2(%arg0: i32) -> (i32, i32) {
    %c0_i32 = arith.constant 0 : i32
    %c0_i32_0 = arith.constant 0 : i32
    %c0_i32_1 = arith.constant 0 : i32
    return %c0_i32, %c0_i32_0 : i32, i32
  }
  func.func @transform_3(%arg0: i32) -> (i32, i32) {
    %c0_i32 = arith.constant 0 : i32
    %c0_i32_0 = arith.constant 0 : i32
    %c0_i32_1 = arith.constant 0 : i32
    return %c0_i32, %c0_i32_0 : i32, i32
  }
  func.func @transform_4(%arg0: i32) -> (i32, i32) {
    %c0_i32 = arith.constant 0 : i32
    %c0_i32_0 = arith.constant 0 : i32
    return %arg0, %c0_i32 : i32, i32
  }
}

</mosaic_0001>

<llo_original>
// kernel: tpu_custom_call.1
$region0: #{tpu_custom_call.1}
  #allocation0 [shape = 'u32[]', space=smem, size = 0x4, offset = 0x4, fixed_abs, tag = 'smem constant byte address 0x4 - core index']
  #allocation1 [shape = 'u32[144,128]{1,0:T(1,128)}', space=vmem, size = 0x12000, scoped, tag = 'internal scratch']
  %s0 = inlined_call_operand.vmem [shape: bf16[16,32], index: 0, kind: input, shape index: {}]
  %s1 = inlined_call_operand.vmem [shape: bf16[32,192], index: 1, kind: input, shape index: {}]
  %s2 = inlined_call_operand.vmem [shape: bf16[64,32], index: 2, kind: input, shape index: {}]
  %s3 = inlined_call_operand.vmem [shape: f32[1,32], index: 3, kind: input, shape index: {}]
  %s4 = inlined_call_operand.hbm [shape: f32[16,32], index: 4, kind: output, shape index: {}]
  %s5 = sld [smem:[#allocation0]]
  $region49: #{tpu_custom_call.1} parent=0
    _
  %s7 = ssub.s32 1, %s5
  %s8 = scalar_select 0, %s7, %s5
  $region1: #{tpu_custom_call.1} parent=0
    #allocation2 [shape = 'u8[8192]{0}', space=vmem, size = 0x2000, scoped, tag = 'output window, operand 0']
    #allocation3 [shape = 's32[2]{0}', space=sflag, size = 0x8, scoped, tag = 'scoped memory for tpu_custom_call.1']
    %9 = vsyncpa [#allocation3], 0
    %s10 = scalar_lea.sflag [#allocation3], 1
    %11 = vsyncpa %s10, 0
    loop: start=0, step=1, limit=4
    $region2: #{tpu_custom_call.1} parent=1 // loop_pre_header
      _
    $region3: #{tpu_custom_call.1} parent=1 // loop_header
      %s13 = sphi 0, %s17
      %p14 = scmp.ge.s32.totalorder %s13, 4
      %s23 = sphi 0, %s25
      %s26 = sphi 0, %s23
      %s27 = sphi 0, %s26
      %s43 = sphi 0, %s27
      %s47 = sphi 0, %s47
      %s49 = sphi 0, %s47
      %s50 = sphi 0, %s49
      %s64 = sphi 0, %s50
      %s68 = sphi 0, %s68
      %s70 = sphi 0, %s68
      %s71 = sphi 0, %s70
      %s85 = sphi 0, %s71
      %s89 = sphi 0, %s89
      %s91 = sphi 0, %s89
      %s92 = sphi 0, %s91
      %s106 = sphi 0, %s92
      %s112 = sphi 0, %s114
      %s115 = sphi 0, %s112
      %s116 = sphi 0, %s115
      %s132 = sphi 0, %s116
    $region4: #{tpu_custom_call.1} parent=1 // loop_header_branch
      %16 = sbr.rel (%p14) target = $region8
    $region5: #{tpu_custom_call.1} parent=1 // loop_body
      %s18 = ssub.s32 %s13, 1
      %s19 = ssub.s32 %s13, 2
      %s20 = sadd.s32 %s13, 1
      %s21 = ssub.s32 %s13, %s20
      %p22 = scmp.eq.s32.totalorder %s21, 0
      %s24 = sadd.s32 %s23, 1
      %s25 = scalar_select %p22, %s23, %s24
      %p28 = pneg %p22
      %p29 = scmp.eq.s32.totalorder %s13, 1
      %p30 = por %p28, %p29
      %p31 = scmp.ne.s32.totalorder %s23, %s26
      %p32 = scmp.eq.s32.totalorder %s13, 0
      %p33 = por %p31, %p32
      %p34 = scmp.ne.s32.totalorder %s23, %s26
      %p35 = scmp.eq.s32.totalorder %s18, 1
      %p36 = por %p34, %p35
      %p37 = scmp.ne.s32.totalorder %s26, %s27
      %p38 = scmp.eq.s32.totalorder %s18, 0
      %p39 = por %p37, %p38
      %p40 = scmp.ne.s32.totalorder %s26, %s27
      %p41 = scmp.eq.s32.totalorder %s19, 1
      %p42 = por %p40, %p41
      %p44 = scmp.ne.s32.totalorder %s27, %s43
      %p45 = scmp.eq.s32.totalorder %s19, 0
      %p46 = por %p44, %p45
      %s48 = sadd.s32 %s47, 1
      %p51 = scmp.eq.s32.totalorder %s13, 1
      %p52 = scmp.ne.s32.totalorder %s47, %s49
      %p53 = scmp.eq.s32.totalorder %s13, 0
      %p54 = por %p52, %p53
      %p55 = scmp.ne.s32.totalorder %s47, %s49
      %p56 = scmp.eq.s32.totalorder %s18, 1
      %p57 = por %p55, %p56
      %p58 = scmp.ne.s32.totalorder %s49, %s50
      %p59 = scmp.eq.s32.totalorder %s18, 0
      %p60 = por %p58, %p59
      %p61 = scmp.ne.s32.totalorder %s49, %s50
      %p62 = scmp.eq.s32.totalorder %s19, 1
      %p63 = por %p61, %p62
      %p65 = scmp.ne.s32.totalorder %s50, %s64
      %p66 = scmp.eq.s32.totalorder %s19, 0
      %p67 = por %p65, %p66
      %s69 = sadd.s32 %s68, 1
      %p72 = scmp.eq.s32.totalorder %s13, 1
      %p73 = scmp.ne.s32.totalorder %s68, %s70
      %p74 = scmp.eq.s32.totalorder %s13, 0
      %p75 = por %p73, %p74
      %p76 = scmp.ne.s32.totalorder %s68, %s70
      %p77 = scmp.eq.s32.totalorder %s18, 1
      %p78 = por %p76, %p77
      %p79 = scmp.ne.s32.totalorder %s70, %s71
      %p80 = scmp.eq.s32.totalorder %s18, 0
      %p81 = por %p79, %p80
      %p82 = scmp.ne.s32.totalorder %s70, %s71
      %p83 = scmp.eq.s32.totalorder %s19, 1
      %p84 = por %p82, %p83
      %p86 = scmp.ne.s32.totalorder %s71, %s85
      %p87 = scmp.eq.s32.totalorder %s19, 0
      %p88 = por %p86, %p87
      %s90 = sadd.s32 %s89, 1
      %p93 = scmp.eq.s32.totalorder %s13, 1
      %p94 = scmp.ne.s32.totalorder %s89, %s91
      %p95 = scmp.eq.s32.totalorder %s13, 0
      %p96 = por %p94, %p95
      %p97 = scmp.ne.s32.totalorder %s89, %s91
      %p98 = scmp.eq.s32.totalorder %s18, 1
      %p99 = por %p97, %p98
      %p100 = scmp.ne.s32.totalorder %s91, %s92
      %p101 = scmp.eq.s32.totalorder %s18, 0
      %p102 = por %p100, %p101
      %p103 = scmp.ne.s32.totalorder %s91, %s92
      %p104 = scmp.eq.s32.totalorder %s19, 1
      %p105 = por %p103, %p104
      %p107 = scmp.ne.s32.totalorder %s92, %s106
      %p108 = scmp.eq.s32.totalorder %s19, 0
      %p109 = por %p107, %p108
      %s110 = ssub.s32 %s13, %s20
      %p111 = scmp.eq.s32.totalorder %s110, 0
      %s113 = sadd.s32 %s112, 1
      %s114 = scalar_select %p111, %s112, %s113
      %p117 = pneg %p111
      %p118 = scmp.eq.s32.totalorder %s13, 1
      %p119 = por %p117, %p118
      %p120 = scmp.ne.s32.totalorder %s112, %s115
      %p121 = scmp.eq.s32.totalorder %s13, 0
      %p122 = por %p120, %p121
      %p123 = scmp.ne.s32.totalorder %s112, %s115
      %p124 = scmp.eq.s32.totalorder %s18, 1
      %p125 = por %p123, %p124
      %p126 = scmp.ne.s32.totalorder %s115, %s116
      %p127 = scmp.eq.s32.totalorder %s18, 0
      %p128 = por %p126, %p127
      %p129 = scmp.ne.s32.totalorder %s115, %s116
      %p130 = scmp.eq.s32.totalorder %s19, 1
      %p131 = por %p129, %p130
      %p133 = scmp.ne.s32.totalorder %s116, %s132
      %p134 = scmp.eq.s32.totalorder %s19, 0
      %p135 = por %p133, %p134
      %p136 = scmp.le.s32.totalorder 1, %s13
      %p137 = scmp.lt.s32.totalorder %s13, 3
      %p138 = pnand %p136, %p137
      %p139 = pneg %p138
      // Predicated region
      $region9: #{tpu_custom_call.1} parent=5 // pred_check
        _
      $region10: #{tpu_custom_call.1} parent=5 // pred_check_branch
        %141 = sbr.rel (%p138) target = $region12
      $region11: #{tpu_custom_call.1} parent=5 // pred_region
        %s142 = ssub.s32 %s13, 1
        // Predicated region
        $region13: #{tpu_custom_call.1} parent=11 // pred_check
          %p143 = pneg %p60
        $region14: #{tpu_custom_call.1} parent=11 // pred_check_branch
          %145 = sbr.rel (%p143) target = $region16
        $region15: #{tpu_custom_call.1} parent=11 // pred_region
          _
        $region16: #{tpu_custom_call.1} parent=11 // pred_fallthru
          _
        // Predicated region
        $region17: #{tpu_custom_call.1} parent=11 // pred_check
          %p146 = pneg %p81
        $region18: #{tpu_custom_call.1} parent=11 // pred_check_branch
          %148 = sbr.rel (%p146) target = $region20
        $region19: #{tpu_custom_call.1} parent=11 // pred_region
          _
        $region20: #{tpu_custom_call.1} parent=11 // pred_fallthru
          _
        // Predicated region
        $region21: #{tpu_custom_call.1} parent=11 // pred_check
          %p149 = pneg %p102
        $region22: #{tpu_custom_call.1} parent=11 // pred_check_branch
          %151 = sbr.rel (%p149) target = $region24
        $region23: #{tpu_custom_call.1} parent=11 // pred_region
          _
        $region24: #{tpu_custom_call.1} parent=11 // pred_fallthru
          _
      $region12: #{tpu_custom_call.1} parent=5 // pred_fallthru
        _
      %p152 = scmp.lt.s32.totalorder %s13, 2
      // Predicated region
      $region25: #{tpu_custom_call.1} parent=5 // pred_check
        %p153 = pneg %p152
      $region26: #{tpu_custom_call.1} parent=5 // pred_check_branch
        %155 = sbr.rel (%p153) target = $region28
      $region27: #{tpu_custom_call.1} parent=5 // pred_region
        // Predicated region
        $region29: #{tpu_custom_call.1} parent=27 // pred_check
          %p156 = pneg %p33
        $region30: #{tpu_custom_call.1} parent=27 // pred_check_branch
          %158 = sbr.rel (%p156) target = $region32
        $region31: #{tpu_custom_call.1} parent=27 // pred_region
          %p159 = scmp.lt.s32.totalorder %s13, 1
          %s160 = scalar_select %p159, %s13, 1
          %s161 = smul.addr %s160, 4
          %s162 = scalar_lea.vmem %s0, %s161
        $region32: #{tpu_custom_call.1} parent=27 // pred_fallthru
          _
      $region28: #{tpu_custom_call.1} parent=5 // pred_fallthru
        _
      %p163 = scmp.le.s32.totalorder 1, %s13
      %p164 = scmp.lt.s32.totalorder %s13, 3
      %p165 = pnand %p163, %p164
      %p166 = pneg %p165
      // Predicated region
      $region33: #{tpu_custom_call.1} parent=5 // pred_check
        _
      $region34: #{tpu_custom_call.1} parent=5 // pred_check_branch
        %168 = sbr.rel (%p165) target = $region36
      $region35: #{tpu_custom_call.1} parent=5 // pred_region
        %s169 = ssub.s32 %s13, 1
        %p170 = scmp.lt.s32.totalorder %s18, 1
        %s171 = scalar_select %p170, %s18, 1
        %s172 = smul.addr %s171, 4
        %s173 = scalar_lea.vmem %s0, %s172
        %p174 = pneg %p39
        %p175 = pneg %p36
        %p176 = pneg %p60
        %p177 = pneg %p57
        %p178 = pneg %p81
        %p179 = pneg %p78
        %p180 = pneg %p102
        %p181 = pneg %p99
        %p182 = pneg %p128
        %p183 = pneg %p125
        %s184 = sand.u32 %s115, 1
        %s185 = scalar_lea.sflag [#allocation3], %s184
        %s186 = sand.u32 %s115, 1
        %s187 = smul.addr %s186, 8
        %s188 = scalar_lea.vmem [#allocation2], %s187
        %p189 = scmp.lt.s32.totalorder %s18, 1
        %s190 = scalar_select %p189, %s18, 1
        %s191 = smul.addr %s190, 4
        %s192 = scalar_lea.vmem %s0, %s191
        %v194 = vld [vmem:[%s192] sm:$0xf]
        %v195 = vld [vmem:[%s1] sm:$0xff]
        %v196 = vld [vmem:[%s1 + $0x8] sm:$0xff]
        %v197 = vld [vmem:[%s1 + $0x10] sm:$0xff]
        %v198 = vld [vmem:[%s1 + $0x18] sm:$0xff]
        %v203 = vunpack.c.l.b16 %v195
        %v204 = vunpack.c.h.b16 %v195
        %v205 = vunpack.c.l.b16 %v196
        %v206 = vunpack.c.h.b16 %v196
        %v207 = vunpack.c.l.b16 %v197
        %v208 = vunpack.c.h.b16 %v197
        %v209 = vunpack.c.l.b16 %v198
        %v210 = vunpack.c.h.b16 %v198
        %v211 = vpack.c.b16 %v205, %v203
        %v212 = vpack.c.b16 %v206, %v204
        %v213 = vpack.c.b16 %v209, %v207
        %v214 = vpack.c.b16 %v210, %v208
        %vm219 = vcmask 261120
        %v221 = vsel %vm219, %v194, 0
        %223 = vmatprep.subr.bf16.mxu0 0
        %224 = vmatpush1.bf16.msra.mxu0 0
        %225 = vmatprep.subr.bf16.mxu0 0
        %226 = vmatpush1.bf16.msra.mxu0 0
        %227 = vmatprep.subr.bf16.mxu0 0
        %228 = vmatpush1.bf16.msra.mxu0 0
        %229 = vmatprep.subr.bf16.mxu0 0
        %230 = vmatpush1.bf16.msra.mxu0 0
        %231 = vmatprep.subr.bf16.mxu0 0
        %232 = vmatpush1.bf16.msra.mxu0 0
        %233 = vmatprep.subr.bf16.mxu0 0
        %234 = vmatpush1.bf16.msra.mxu0 0
        %235 = vmatprep.subr.bf16.mxu0 %v214
        %236 = vmatpush1.bf16.msra.mxu0 %v213
        %237 = vmatprep.subr.bf16.mxu0 %v212
        %238 = vmatpush1.bf16.msra.mxu0 %v211
        %239 = vmatprep.subr.bf16.mxu0 0
        %240 = vmatpush2.bf16.msra.mxu0 0
        %241 = vmatprep.subr.bf16.mxu0 0
        %242 = vmatpush2.bf16.msra.mxu0 0
        %243 = vmatprep.subr.bf16.mxu0 0
        %244 = vmatpush2.bf16.msra.mxu0 0
        %245 = vmatprep.subr.bf16.mxu0 0
        %246 = vmatpush2.bf16.msra.mxu0 0
        %247 = vmatprep.subr.bf16.mxu0 0
        %248 = vmatpush2.bf16.msra.mxu0 0
        %249 = vmatprep.subr.bf16.mxu0 0
        %250 = vmatpush2.bf16.msra.mxu0 0
        %251 = vmatprep.subr.bf16.mxu0 0
        %252 = vmatpush2.bf16.msra.mxu0 0
        %253 = vmatprep.subr.bf16.mxu0 0
        %254 = vmatpush2.bf16.msra.mxu0 0
        %255 = vmatprep.mubr.bf16.mxu0 0
        %256 = vmatmul.mubr.bf16.gmra.mxu0 %v221
        %v257 = vpop.f32.mrf.mxu0
        %v258 = vadd.f32 0.0, %v257
        %v259 = vpop.f32.mrf.mxu0
        %v260 = vadd.f32 0.0, %v259
        %v261 = vpop.f32.mrf.mxu0
        %v262 = vpop.f32.mrf.mxu0
        %263 = vdwg.mxu0
        %v264 = vpack.c.bf16 %v258, %v258
        %v265 = vpack.c.bf16 %v260, %v260
        %267 = vrot.lane.b32.xlu0 %v264, 64
        %v268 = vpop.permute.xlu0 %267
        %vm269 = vcmask 130048
        %v271 = vsel %vm269, %v264, 0
        %v274 = vsel %vm269, %v268, 0
        %276 = vmatprep.subr.bf16.mxu0 0
        %277 = vmatpush1.bf16.xpose.msra.mxu0 0
        %278 = vmatprep.subr.bf16.mxu0 0
        %279 = vmatpush1.bf16.xpose.msra.mxu0 0
        %280 = vmatprep.subr.bf16.mxu0 0
        %281 = vmatpush1.bf16.xpose.msra.mxu0 0
        %282 = vmatprep.subr.bf16.mxu0 0
        %283 = vmatpush1.bf16.xpose.msra.mxu0 0
        %284 = vmatprep.subr.bf16.mxu0 0
        %285 = vmatpush1.bf16.xpose.msra.mxu0 0
        %286 = vmatprep.subr.bf16.mxu0 0
        %287 = vmatpush1.bf16.xpose.msra.mxu0 0
        %288 = vmatprep.subr.bf16.mxu0 0
        %289 = vmatpush1.bf16.xpose.msra.mxu0 0
        %290 = vmatprep.subr.bf16.mxu0 0
        %291 = vmatpush1.bf16.xpose.msra.mxu0 %v274
        %292 = vmatprep.subr.bf16.mxu0 0
        %293 = vmatpush2.bf16.xpose.msra.mxu0 0
        %294 = vmatprep.subr.bf16.mxu0 0
        %295 = vmatpush2.bf16.xpose.msra.mxu0 0
        %296 = vmatprep.subr.bf16.mxu0 0
        %297 = vmatpush2.bf16.xpose.msra.mxu0 0
        %298 = vmatprep.subr.bf16.mxu0 0
        %299 = vmatpush2.bf16.xpose.msra.mxu0 0
        %300 = vmatprep.subr.bf16.mxu0 0
        %301 = vmatpush2.bf16.xpose.msra.mxu0 0
        %302 = vmatprep.subr.bf16.mxu0 0
        %303 = vmatpush2.bf16.xpose.msra.mxu0 0
        %304 = vmatprep.subr.bf16.mxu0 0
        %305 = vmatpush2.bf16.xpose.msra.mxu0 0
        %306 = vmatprep.subr.bf16.mxu0 0
        %307 = vmatpush2.bf16.xpose.msra.mxu0 0
        %308 = vmatprep.mubr.bf16.mxu0 0
        %309 = vmatmul.mubr.bf16.gmra.mxu0 %v271
        %v310 = vpop.f32.mrf.mxu0
        %v311 = vadd.f32 0.0, %v310
        %v312 = vpop.f32.mrf.mxu0
        %v313 = vpop.f32.mrf.mxu0
        %v314 = vpop.f32.mrf.mxu0
        %315 = vdwg.mxu0
        %vm316 = vcmask 64512
        %v317 = vsel %vm316, %v311, -inf
        %318 = vmax.xlane.f32.xlu0 %v317
        %v319 = vpop.xlane.xlu0 %318
        %v320 = vsub.f32 %v311, %v319
        %v321 = vmul.f32 %v320, 1.442695
        %v322 = vpow.pop %v321
        %v323 = vsel %vm316, %v322, 0.0
        %324 = vadd.xlane.f32.xlu0 %v323
        %v325 = vpop.xlane.xlu0 %324
        %v326 = vrcp.pop %v325
        %v327 = vmul.f32 %v322, %v326
        %v328 = vpack.c.bf16 %v327, %v327
        %v330 = vsel %vm316, %v328, 0
        %vm332 = vcmask 1043456
        %v334 = vsel %vm332, %v265, 0
        %336 = vmatprep.subr.bf16.mxu0 0
        %337 = vmatpush1.bf16.msra.mxu0 0
        %338 = vmatprep.subr.bf16.mxu0 0
        %339 = vmatpush1.bf16.msra.mxu0 0
        %340 = vmatprep.subr.bf16.mxu0 0
        %341 = vmatpush1.bf16.msra.mxu0 0
        %342 = vmatprep.subr.bf16.mxu0 0
        %343 = vmatpush1.bf16.msra.mxu0 0
        %344 = vmatprep.subr.bf16.mxu0 0
        %345 = vmatpush1.bf16.msra.mxu0 0
        %346 = vmatprep.subr.bf16.mxu0 0
        %347 = vmatpush1.bf16.msra.mxu0 0
        %348 = vmatprep.subr.bf16.mxu0 0
        %349 = vmatpush1.bf16.msra.mxu0 0
        %350 = vmatprep.subr.bf16.mxu0 0
        %351 = vmatpush1.bf16.msra.mxu0 %v334
        %352 = vmatprep.subr.bf16.mxu0 0
        %353 = vmatpush2.bf16.msra.mxu0 0
        %354 = vmatprep.subr.bf16.mxu0 0
        %355 = vmatpush2.bf16.msra.mxu0 0
        %356 = vmatprep.subr.bf16.mxu0 0
        %357 = vmatpush2.bf16.msra.mxu0 0
        %358 = vmatprep.subr.bf16.mxu0 0
        %359 = vmatpush2.bf16.msra.mxu0 0
        %360 = vmatprep.subr.bf16.mxu0 0
        %361 = vmatpush2.bf16.msra.mxu0 0
        %362 = vmatprep.subr.bf16.mxu0 0
        %363 = vmatpush2.bf16.msra.mxu0 0
        %364 = vmatprep.subr.bf16.mxu0 0
        %365 = vmatpush2.bf16.msra.mxu0 0
        %366 = vmatprep.subr.bf16.mxu0 0
        %367 = vmatpush2.bf16.msra.mxu0 0
        %368 = vmatprep.mubr.bf16.mxu0 0
        %369 = vmatmul.mubr.bf16.gmra.mxu0 %v330
        %v370 = vpop.f32.mrf.mxu0
        %v371 = vadd.f32 0.0, %v370
        %v372 = vpop.f32.mrf.mxu0
        %v373 = vpop.f32.mrf.mxu0
        %v374 = vpop.f32.mrf.mxu0
        %375 = vdwg.mxu0
        %376 = vrot.lane.b32.xlu0 %v264, 112
        %v377 = vpop.permute.xlu0 %376
        %378 = vrot.lane.b32.xlu0 %v264, 48
        %v379 = vpop.permute.xlu0 %378
        %v381 = vsel %vm269, %v377, 0
        %v384 = vsel %vm269, %v379, 0
        %386 = vmatprep.subr.bf16.mxu0 0
        %387 = vmatpush1.bf16.xpose.msra.mxu0 0
        %388 = vmatprep.subr.bf16.mxu0 0
        %389 = vmatpush1.bf16.xpose.msra.mxu0 0
        %390 = vmatprep.subr.bf16.mxu0 0
        %391 = vmatpush1.bf16.xpose.msra.mxu0 0
        %392 = vmatprep.subr.bf16.mxu0 0
        %393 = vmatpush1.bf16.xpose.msra.mxu0 0
        %394 = vmatprep.subr.bf16.mxu0 0
        %395 = vmatpush1.bf16.xpose.msra.mxu0 0
        %396 = vmatprep.subr.bf16.mxu0 0
        %397 = vmatpush1.bf16.xpose.msra.mxu0 0
        %398 = vmatprep.subr.bf16.mxu0 0
        %399 = vmatpush1.bf16.xpose.msra.mxu0 0
        %400 = vmatprep.subr.bf16.mxu0 0
        %401 = vmatpush1.bf16.xpose.msra.mxu0 %v384
        %402 = vmatprep.subr.bf16.mxu0 0
        %403 = vmatpush2.bf16.xpose.msra.mxu0 0
        %404 = vmatprep.subr.bf16.mxu0 0
        %405 = vmatpush2.bf16.xpose.msra.mxu0 0
        %406 = vmatprep.subr.bf16.mxu0 0
        %407 = vmatpush2.bf16.xpose.msra.mxu0 0
        %408 = vmatprep.subr.bf16.mxu0 0
        %409 = vmatpush2.bf16.xpose.msra.mxu0 0
        %410 = vmatprep.subr.bf16.mxu0 0
        %411 = vmatpush2.bf16.xpose.msra.mxu0 0
        %412 = vmatprep.subr.bf16.mxu0 0
        %413 = vmatpush2.bf16.xpose.msra.mxu0 0
        %414 = vmatprep.subr.bf16.mxu0 0
        %415 = vmatpush2.bf16.xpose.msra.mxu0 0
        %416 = vmatprep.subr.bf16.mxu0 0
        %417 = vmatpush2.bf16.xpose.msra.mxu0 0
        %418 = vmatprep.mubr.bf16.mxu0 0
        %419 = vmatmul.mubr.bf16.gmra.mxu0 %v381
        %v420 = vpop.f32.mrf.mxu0
        %v421 = vadd.f32 0.0, %v420
        %v422 = vpop.f32.mrf.mxu0
        %v423 = vpop.f32.mrf.mxu0
        %v424 = vpop.f32.mrf.mxu0
        %425 = vdwg.mxu0
        %v426 = vsel %vm316, %v421, -inf
        %427 = vmax.xlane.f32.xlu0 %v426
        %v428 = vpop.xlane.xlu0 %427
        %v429 = vsub.f32 %v421, %v428
        %v430 = vmul.f32 %v429, 1.442695
        %v431 = vpow.pop %v430
        %v432 = vsel %vm316, %v431, 0.0
        %433 = vadd.xlane.f32.xlu0 %v432
        %v434 = vpop.xlane.xlu0 %433
        %v435 = vrcp.pop %v434
        %v436 = vmul.f32 %v431, %v435
        %v437 = vpack.c.bf16 %v436, %v436
        %439 = vrot.lane.b32.xlu0 %v265, 112
        %v440 = vpop.permute.xlu0 %439
        %v442 = vsel %vm316, %v437, 0
        %v445 = vsel %vm332, %v440, 0
        %447 = vmatprep.subr.bf16.mxu0 0
        %448 = vmatpush1.bf16.msra.mxu0 0
        %449 = vmatprep.subr.bf16.mxu0 0
        %450 = vmatpush1.bf16.msra.mxu0 0
        %451 = vmatprep.subr.bf16.mxu0 0
        %452 = vmatpush1.bf16.msra.mxu0 0
        %453 = vmatprep.subr.bf16.mxu0 0
        %454 = vmatpush1.bf16.msra.mxu0 0
        %455 = vmatprep.subr.bf16.mxu0 0
        %456 = vmatpush1.bf16.msra.mxu0 0
        %457 = vmatprep.subr.bf16.mxu0 0
        %458 = vmatpush1.bf16.msra.mxu0 0
        %459 = vmatprep.subr.bf16.mxu0 0
        %460 = vmatpush1.bf16.msra.mxu0 0
        %461 = vmatprep.subr.bf16.mxu0 0
        %462 = vmatpush1.bf16.msra.mxu0 %v445
        %463 = vmatprep.subr.bf16.mxu0 0
        %464 = vmatpush2.bf16.msra.mxu0 0
        %465 = vmatprep.subr.bf16.mxu0 0
        %466 = vmatpush2.bf16.msra.mxu0 0
        %467 = vmatprep.subr.bf16.mxu0 0
        %468 = vmatpush2.bf16.msra.mxu0 0
        %469 = vmatprep.subr.bf16.mxu0 0
        %470 = vmatpush2.bf16.msra.mxu0 0
        %471 = vmatprep.subr.bf16.mxu0 0
        %472 = vmatpush2.bf16.msra.mxu0 0
        %473 = vmatprep.subr.bf16.mxu0 0
        %474 = vmatpush2.bf16.msra.mxu0 0
        %475 = vmatprep.subr.bf16.mxu0 0
        %476 = vmatpush2.bf16.msra.mxu0 0
        %477 = vmatprep.subr.bf16.mxu0 0
        %478 = vmatpush2.bf16.msra.mxu0 0
        %479 = vmatprep.mubr.bf16.mxu0 0
        %480 = vmatmul.mubr.bf16.gmra.mxu0 %v442
        %v481 = vpop.f32.mrf.mxu0
        %v482 = vadd.f32 0.0, %v481
        %v483 = vpop.f32.mrf.mxu0
        %v484 = vpop.f32.mrf.mxu0
        %v485 = vpop.f32.mrf.mxu0
        %486 = vdwg.mxu0
        %487 = vrot.lane.b32.xlu0 %v264, 96
        %v488 = vpop.permute.xlu0 %487
        %489 = vrot.lane.b32.xlu0 %v264, 32
        %v490 = vpop.permute.xlu0 %489
        %v492 = vsel %vm269, %v488, 0
        %v495 = vsel %vm269, %v490, 0
        %497 = vmatprep.subr.bf16.mxu0 0
        %498 = vmatpush1.bf16.xpose.msra.mxu0 0
        %499 = vmatprep.subr.bf16.mxu0 0
        %500 = vmatpush1.bf16.xpose.msra.mxu0 0
        %501 = vmatprep.subr.bf16.mxu0 0
        %502 = vmatpush1.bf16.xpose.msra.mxu0 0
        %503 = vmatprep.subr.bf16.mxu0 0
        %504 = vmatpush1.bf16.xpose.msra.mxu0 0
        %505 = vmatprep.subr.bf16.mxu0 0
        %506 = vmatpush1.bf16.xpose.msra.mxu0 0
        %507 = vmatprep.subr.bf16.mxu0 0
        %508 = vmatpush1.bf16.xpose.msra.mxu0 0
        %509 = vmatprep.subr.bf16.mxu0 0
        %510 = vmatpush1.bf16.xpose.msra.mxu0 0
        %511 = vmatprep.subr.bf16.mxu0 0
        %512 = vmatpush1.bf16.xpose.msra.mxu0 %v495
        %513 = vmatprep.subr.bf16.mxu0 0
        %514 = vmatpush2.bf16.xpose.msra.mxu0 0
        %515 = vmatprep.subr.bf16.mxu0 0
        %516 = vmatpush2.bf16.xpose.msra.mxu0 0
        %517 = vmatprep.subr.bf16.mxu0 0
        %518 = vmatpush2.bf16.xpose.msra.mxu0 0
        %519 = vmatprep.subr.bf16.mxu0 0
        %520 = vmatpush2.bf16.xpose.msra.mxu0 0
        %521 = vmatprep.subr.bf16.mxu0 0
        %522 = vmatpush2.bf16.xpose.msra.mxu0 0
        %523 = vmatprep.subr.bf16.mxu0 0
        %524 = vmatpush2.bf16.xpose.msra.mxu0 0
        %525 = vmatprep.subr.bf16.mxu0 0
        %526 = vmatpush2.bf16.xpose.msra.mxu0 0
        %527 = vmatprep.subr.bf16.mxu0 0
        %528 = vmatpush2.bf16.xpose.msra.mxu0 0
        %529 = vmatprep.mubr.bf16.mxu0 0
        %530 = vmatmul.mubr.bf16.gmra.mxu0 %v492
        %v531 = vpop.f32.mrf.mxu0
        %v532 = vadd.f32 0.0, %v531
        %v533 = vpop.f32.mrf.mxu0
        %v534 = vpop.f32.mrf.mxu0
        %v535 = vpop.f32.mrf.mxu0
        %536 = vdwg.mxu0
        %v537 = vsel %vm316, %v532, -inf
        %538 = vmax.xlane.f32.xlu0 %v537
        %v539 = vpop.xlane.xlu0 %538
        %v540 = vsub.f32 %v532, %v539
        %v541 = vmul.f32 %v540, 1.442695
        %v542 = vpow.pop %v541
        %v543 = vsel %vm316, %v542, 0.0
        %544 = vadd.xlane.f32.xlu0 %v543
        %v545 = vpop.xlane.xlu0 %544
        %v546 = vrcp.pop %v545
        %v547 = vmul.f32 %v542, %v546
        %v548 = vpack.c.bf16 %v547, %v547
        %549 = vrot.lane.b32.xlu0 %v265, 96
        %v550 = vpop.permute.xlu0 %549
        %v552 = vsel %vm316, %v548, 0
        %v555 = vsel %vm332, %v550, 0
        %557 = vmatprep.subr.bf16.mxu0 0
        %558 = vmatpush1.bf16.msra.mxu0 0
        %559 = vmatprep.subr.bf16.mxu0 0
        %560 = vmatpush1.bf16.msra.mxu0 0
        %561 = vmatprep.subr.bf16.mxu0 0
        %562 = vmatpush1.bf16.msra.mxu0 0
        %563 = vmatprep.subr.bf16.mxu0 0
        %564 = vmatpush1.bf16.msra.mxu0 0
        %565 = vmatprep.subr.bf16.mxu0 0
        %566 = vmatpush1.bf16.msra.mxu0 0
        %567 = vmatprep.subr.bf16.mxu0 0
        %568 = vmatpush1.bf16.msra.mxu0 0
        %569 = vmatprep.subr.bf16.mxu0 0
        %570 = vmatpush1.bf16.msra.mxu0 0
        %571 = vmatprep.subr.bf16.mxu0 0
        %572 = vmatpush1.bf16.msra.mxu0 %v555
        %573 = vmatprep.subr.bf16.mxu0 0
        %574 = vmatpush2.bf16.msra.mxu0 0
        %575 = vmatprep.subr.bf16.mxu0 0
        %576 = vmatpush2.bf16.msra.mxu0 0
        %577 = vmatprep.subr.bf16.mxu0 0
        %578 = vmatpush2.bf16.msra.mxu0 0
        %579 = vmatprep.subr.bf16.mxu0 0
        %580 = vmatpush2.bf16.msra.mxu0 0
        %581 = vmatprep.subr.bf16.mxu0 0
        %582 = vmatpush2.bf16.msra.mxu0 0
        %583 = vmatprep.subr.bf16.mxu0 0
        %584 = vmatpush2.bf16.msra.mxu0 0
        %585 = vmatprep.subr.bf16.mxu0 0
        %586 = vmatpush2.bf16.msra.mxu0 0
        %587 = vmatprep.subr.bf16.mxu0 0
        %588 = vmatpush2.bf16.msra.mxu0 0
        %589 = vmatprep.mubr.bf16.mxu0 0
        %590 = vmatmul.mubr.bf16.gmra.mxu0 %v552
        %v591 = vpop.f32.mrf.mxu0
        %v592 = vadd.f32 0.0, %v591
        %v593 = vpop.f32.mrf.mxu0
        %v594 = vpop.f32.mrf.mxu0
        %v595 = vpop.f32.mrf.mxu0
        %596 = vdwg.mxu0
        %597 = vrot.lane.b32.xlu0 %v264, 80
        %v598 = vpop.permute.xlu0 %597
        %599 = vrot.lane.b32.xlu0 %v264, 16
        %v600 = vpop.permute.xlu0 %599
        %v602 = vsel %vm269, %v598, 0
        %v605 = vsel %vm269, %v600, 0
        %607 = vmatprep.subr.bf16.mxu0 0
        %608 = vmatpush1.bf16.xpose.msra.mxu0 0
        %609 = vmatprep.subr.bf16.mxu0 0
        %610 = vmatpush1.bf16.xpose.msra.mxu0 0
        %611 = vmatprep.subr.bf16.mxu0 0
        %612 = vmatpush1.bf16.xpose.msra.mxu0 0
        %613 = vmatprep.subr.bf16.mxu0 0
        %614 = vmatpush1.bf16.xpose.msra.mxu0 0
        %615 = vmatprep.subr.bf16.mxu0 0
        %616 = vmatpush1.bf16.xpose.msra.mxu0 0
        %617 = vmatprep.subr.bf16.mxu0 0
        %618 = vmatpush1.bf16.xpose.msra.mxu0 0
        %619 = vmatprep.subr.bf16.mxu0 0
        %620 = vmatpush1.bf16.xpose.msra.mxu0 0
        %621 = vmatprep.subr.bf16.mxu0 0
        %622 = vmatpush1.bf16.xpose.msra.mxu0 %v605
        %623 = vmatprep.subr.bf16.mxu0 0
        %624 = vmatpush2.bf16.xpose.msra.mxu0 0
        %625 = vmatprep.subr.bf16.mxu0 0
        %626 = vmatpush2.bf16.xpose.msra.mxu0 0
        %627 = vmatprep.subr.bf16.mxu0 0
        %628 = vmatpush2.bf16.xpose.msra.mxu0 0
        %629 = vmatprep.subr.bf16.mxu0 0
        %630 = vmatpush2.bf16.xpose.msra.mxu0 0
        %631 = vmatprep.subr.bf16.mxu0 0
        %632 = vmatpush2.bf16.xpose.msra.mxu0 0
        %633 = vmatprep.subr.bf16.mxu0 0
        %634 = vmatpush2.bf16.xpose.msra.mxu0 0
        %635 = vmatprep.subr.bf16.mxu0 0
        %636 = vmatpush2.bf16.xpose.msra.mxu0 0
        %637 = vmatprep.subr.bf16.mxu0 0
        %638 = vmatpush2.bf16.xpose.msra.mxu0 0
        %639 = vmatprep.mubr.bf16.mxu0 0
        %640 = vmatmul.mubr.bf16.gmra.mxu0 %v602
        %v641 = vpop.f32.mrf.mxu0
        %v642 = vadd.f32 0.0, %v641
        %v643 = vpop.f32.mrf.mxu0
        %v644 = vpop.f32.mrf.mxu0
        %v645 = vpop.f32.mrf.mxu0
        %646 = vdwg.mxu0
        %v647 = vsel %vm316, %v642, -inf
        %648 = vmax.xlane.f32.xlu0 %v647
        %v649 = vpop.xlane.xlu0 %648
        %v650 = vsub.f32 %v642, %v649
        %v651 = vmul.f32 %v650, 1.442695
        %v652 = vpow.pop %v651
        %v653 = vsel %vm316, %v652, 0.0
        %654 = vadd.xlane.f32.xlu0 %v653
        %v655 = vpop.xlane.xlu0 %654
        %v656 = vrcp.pop %v655
        %v657 = vmul.f32 %v652, %v656
        %v658 = vpack.c.bf16 %v657, %v657
        %659 = vrot.lane.b32.xlu0 %v265, 80
        %v660 = vpop.permute.xlu0 %659
        %v662 = vsel %vm316, %v658, 0
        %v665 = vsel %vm332, %v660, 0
        %667 = vmatprep.subr.bf16.mxu0 0
        %668 = vmatpush1.bf16.msra.mxu0 0
        %669 = vmatprep.subr.bf16.mxu0 0
        %670 = vmatpush1.bf16.msra.mxu0 0
        %671 = vmatprep.subr.bf16.mxu0 0
        %672 = vmatpush1.bf16.msra.mxu0 0
        %673 = vmatprep.subr.bf16.mxu0 0
        %674 = vmatpush1.bf16.msra.mxu0 0
        %675 = vmatprep.subr.bf16.mxu0 0
        %676 = vmatpush1.bf16.msra.mxu0 0
        %677 = vmatprep.subr.bf16.mxu0 0
        %678 = vmatpush1.bf16.msra.mxu0 0
        %679 = vmatprep.subr.bf16.mxu0 0
        %680 = vmatpush1.bf16.msra.mxu0 0
        %681 = vmatprep.subr.bf16.mxu0 0
        %682 = vmatpush1.bf16.msra.mxu0 %v665
        %683 = vmatprep.subr.bf16.mxu0 0
        %684 = vmatpush2.bf16.msra.mxu0 0
        %685 = vmatprep.subr.bf16.mxu0 0
        %686 = vmatpush2.bf16.msra.mxu0 0
        %687 = vmatprep.subr.bf16.mxu0 0
        %688 = vmatpush2.bf16.msra.mxu0 0
        %689 = vmatprep.subr.bf16.mxu0 0
        %690 = vmatpush2.bf16.msra.mxu0 0
        %691 = vmatprep.subr.bf16.mxu0 0
        %692 = vmatpush2.bf16.msra.mxu0 0
        %693 = vmatprep.subr.bf16.mxu0 0
        %694 = vmatpush2.bf16.msra.mxu0 0
        %695 = vmatprep.subr.bf16.mxu0 0
        %696 = vmatpush2.bf16.msra.mxu0 0
        %697 = vmatprep.subr.bf16.mxu0 0
        %698 = vmatpush2.bf16.msra.mxu0 0
        %699 = vmatprep.mubr.bf16.mxu0 0
        %700 = vmatmul.mubr.bf16.gmra.mxu0 %v662
        %v701 = vpop.f32.mrf.mxu0
        %v702 = vadd.f32 0.0, %v701
        %v703 = vpop.f32.mrf.mxu0
        %v704 = vpop.f32.mrf.mxu0
        %v705 = vpop.f32.mrf.mxu0
        %706 = vdwg.mxu0
        %708 = vrot.lane.b32.xlu0 %v482, 16
        %v709 = vpop.permute.xlu0 %708
        %712 = vrot.lane.b32.xlu0 %v592, 32
        %v713 = vpop.permute.xlu0 %712
        %716 = vrot.lane.b32.xlu0 %v702, 48
        %v717 = vpop.permute.xlu0 %716
        %v719 = vsel %vm269, %v371, %v709
        %v720 = vsel %vm219, %v719, %v713
        %vm721 = vcmask 392192
        %v722 = vsel %vm721, %v720, %v717
        %v723 = vpack.c.bf16 %v722, %v722
        %v724 = vld [vmem:[%s2] sm:$0xf]
        %v725 = vld [vmem:[%s2 + $0x4] sm:$0xf]
        %v726 = vld [vmem:[%s2 + $0x8] sm:$0xf]
        %v727 = vld [vmem:[%s2 + $0xc] sm:$0xf]
        %v728 = vld [vmem:[%s2 + $0x10] sm:$0xf]
        %v729 = vld [vmem:[%s2 + $0x14] sm:$0xf]
        %v730 = vld [vmem:[%s2 + $0x18] sm:$0xf]
        %v731 = vld [vmem:[%s2 + $0x1c] sm:$0xf]
        %v732 = vld [vmem:[%s3] sm:$0x1]
        %v734 = vlaneseq
        %v735 = vshrl.u32 %v734, 7
        %v736 = vsub.s32 0, %v735
        %v737 = vrot.slane %v732, %v736
        %v747 = vunpack.c.l.b16 %v724
        %v748 = vunpack.c.l.b16 %v725
        %v749 = vunpack.c.l.b16 %v726
        %v750 = vunpack.c.l.b16 %v727
        %v751 = vunpack.c.l.b16 %v728
        %v752 = vunpack.c.l.b16 %v729
        %v753 = vunpack.c.l.b16 %v730
        %v754 = vunpack.c.l.b16 %v731
        %v755 = vpack.c.b16 %v748, %v747
        %v756 = vpack.c.b16 %v750, %v749
        %v757 = vpack.c.b16 %v752, %v751
        %v758 = vpack.c.b16 %v754, %v753
        %vm763 = vcmask 523264
        %v765 = vsel %vm763, %v723, 0
        %767 = vmatprep.subr.bf16.mxu0 0
        %768 = vmatpush1.bf16.msra.mxu0 0
        %769 = vmatprep.subr.bf16.mxu0 0
        %770 = vmatpush1.bf16.msra.mxu0 0
        %771 = vmatprep.subr.bf16.mxu0 0
        %772 = vmatpush1.bf16.msra.mxu0 0
        %773 = vmatprep.subr.bf16.mxu0 0
        %774 = vmatpush1.bf16.msra.mxu0 0
        %775 = vmatprep.subr.bf16.mxu0 0
        %776 = vmatpush1.bf16.msra.mxu0 %v758
        %777 = vmatprep.subr.bf16.mxu0 0
        %778 = vmatpush1.bf16.msra.mxu0 %v757
        %779 = vmatprep.subr.bf16.mxu0 0
        %780 = vmatpush1.bf16.msra.mxu0 %v756
        %781 = vmatprep.subr.bf16.mxu0 0
        %782 = vmatpush1.bf16.msra.mxu0 %v755
        %783 = vmatprep.subr.bf16.mxu0 0
        %784 = vmatpush2.bf16.msra.mxu0 0
        %785 = vmatprep.subr.bf16.mxu0 0
        %786 = vmatpush2.bf16.msra.mxu0 0
        %787 = vmatprep.subr.bf16.mxu0 0
        %788 = vmatpush2.bf16.msra.mxu0 0
        %789 = vmatprep.subr.bf16.mxu0 0
        %790 = vmatpush2.bf16.msra.mxu0 0
        %791 = vmatprep.subr.bf16.mxu0 0
        %792 = vmatpush2.bf16.msra.mxu0 0
        %793 = vmatprep.subr.bf16.mxu0 0
        %794 = vmatpush2.bf16.msra.mxu0 0
        %795 = vmatprep.subr.bf16.mxu0 0
        %796 = vmatpush2.bf16.msra.mxu0 0
        %797 = vmatprep.subr.bf16.mxu0 0
        %798 = vmatpush2.bf16.msra.mxu0 0
        %799 = vmatprep.mubr.bf16.mxu0 0
        %800 = vmatmul.mubr.bf16.gmra.mxu0 %v765
        %v801 = vpop.f32.mrf.mxu0
        %v802 = vadd.f32 %v737, %v801
        %v803 = vpop.f32.mrf.mxu0
        %v804 = vpop.f32.mrf.mxu0
        %v805 = vpop.f32.mrf.mxu0
        %806 = vdwg.mxu0
        %807 = vst.msk [vmem:[%s188] sm:$0xff] %vm219, %v802
        %s808 = sand.u32 %s115, 1
        %s809 = scalar_lea.sflag [#allocation3], %s808
        %s810 = sand.u32 %s115, 1
        %s811 = smul.addr %s810, 8
        %s812 = scalar_lea.vmem [#allocation2], %s811
        // Predicated region
        $region37: #{tpu_custom_call.1} parent=35 // pred_check
          %p813 = pneg %p125
        $region38: #{tpu_custom_call.1} parent=35 // pred_check_branch
          %815 = sbr.rel (%p813) target = $region40
        $region39: #{tpu_custom_call.1} parent=35 // pred_region
          %s817 = ssub.s32 128, 128
          %818 = vsyncadd %s809, %s817
          %s819 = smul.addr %s18, 128
          %s820 = scalar_lea.hbm %s4, %s819
          %s822 = sshll.u32 %s812, 4
          %s823 = int_to_ptr.vmem [resolvable:$true] %s822
          %825 = dma.vmem_to_hbm [thread:$0]  %s823, 128, %s820, %s809
        $region40: #{tpu_custom_call.1} parent=35 // pred_fallthru
          _
      $region36: #{tpu_custom_call.1} parent=5 // pred_fallthru
        _
      %p826 = scmp.le.s32.totalorder 2, %s13
      // Predicated region
      $region41: #{tpu_custom_call.1} parent=5 // pred_check
        %p827 = pneg %p826
      $region42: #{tpu_custom_call.1} parent=5 // pred_check_branch
        %829 = sbr.rel (%p827) target = $region44
      $region43: #{tpu_custom_call.1} parent=5 // pred_region
        %s830 = ssub.s32 %s13, 2
        // Predicated region
        $region45: #{tpu_custom_call.1} parent=43 // pred_check
          %p831 = pneg %p131
        $region46: #{tpu_custom_call.1} parent=43 // pred_check_branch
          %833 = sbr.rel (%p831) target = $region48
        $region47: #{tpu_custom_call.1} parent=43 // pred_region
          %s834 = sand.u32 %s116, 1
          %s835 = scalar_lea.sflag [#allocation3], %s834
          %s836 = sand.u32 %s116, 1
          %s837 = smul.addr %s836, 8
          %s838 = scalar_lea.vmem [#allocation2], %s837
          %839 = dma.done %s835, 128
        $region48: #{tpu_custom_call.1} parent=43 // pred_fallthru
          _
      $region44: #{tpu_custom_call.1} parent=5 // pred_fallthru
        _
    $region6: #{tpu_custom_call.1} parent=1 // loop_footer
      %s17 = sadd.s32 1, %s13
    $region7: #{tpu_custom_call.1} parent=1 // loop_footer_branch
      %12 = sbr.rel target = $region3
    $region8: #{tpu_custom_call.1} parent=1 // loop_exit
      _
    %840 = vsyncpa [#allocation3], 1
    %s841 = scalar_lea.sflag [#allocation3], 1
    %842 = vsyncpa %s841, 1

</llo_original>
